<compile_context>
chip_gen: v6e
topology: v6e:2x2x1
jax: 0.10.0
libtpu: 0.0.40
codegen_flags: <defaults>
</compile_context>

<pallas_src>
import functools

import jax
import jax.numpy as jnp
from jax import lax
from jax.experimental import pallas as pl
from jax.experimental.pallas import tpu as pltpu

_SMEM_SPEC = pl.BlockSpec(memory_space=pltpu.MemorySpace.SMEM)
_HEADROOM = 4 * 1024 * 1024  # semaphores / compiler scratch headroom


def _vmem_limit():
    """Generation-aware VMEM budget: ~3/4 of physical, capped at 96 MiB."""
    try:
        cap = int(pltpu.get_tpu_info().vmem_capacity_bytes)
        return max(32 * 1024 * 1024, min(3 * cap // 4, 96 * 1024 * 1024))
    except Exception:
        return 48 * 1024 * 1024  # safe on v5e / v6e / v7x


_VMEM_LIMIT = _vmem_limit()


def _params(*sem):
    return pltpu.CompilerParams(dimension_semantics=sem,
                                vmem_limit_bytes=_VMEM_LIMIT)


def _round_up(n, m):
    return ((n + m - 1) // m) * m


# ------------------------- single-buffer weight probe ------------------------

@functools.lru_cache(maxsize=None)
def _single_buffer_ok():
    """True if pipeline_mode=pl.Buffered(1) works on this jax / Mosaic."""
    try:
        def k(a_ref, w_ref, o_ref):
            o_ref[...] = a_ref[...] + w_ref[...]

        z = jnp.zeros((8, 128), jnp.float32)
        out = pl.pallas_call(
            k,
            out_shape=jax.ShapeDtypeStruct((8, 128), jnp.float32),
            grid=(1,),
            in_specs=[pl.BlockSpec((8, 128), lambda i: (0, 0)),
                      pl.BlockSpec((8, 128), lambda i: (0, 0),
                                   pipeline_mode=pl.Buffered(1))],
            out_specs=pl.BlockSpec((8, 128), lambda i: (0, 0)),
            compiler_params=_params("arbitrary"),
        )(z, z)
        jax.block_until_ready(out)
        return True
    except Exception:
        return False


def _const_spec(shape):
    """BlockSpec for a block whose index never changes (weights / biases)."""
    idx = lambda *_: (0,) * len(shape)
    if _single_buffer_ok():
        return pl.BlockSpec(shape, idx, pipeline_mode=pl.Buffered(1))
    return pl.BlockSpec(shape, idx)


# ------------------------------- tiling utils -------------------------------

def _row_tile(n, per_row_bytes, resident_bytes=0):
    """Row tile: full array if n < 128, else a budget-sized multiple of 128."""
    n = int(n)
    if n < 128:
        return max(n, 1)
    budget = _VMEM_LIMIT - _HEADROOM - int(resident_bytes)
    t = budget // (2 * max(int(per_row_bytes), 1))   # 2 pipeline buffers
    t = (t // 128) * 128
    t = max(128, min(1024, t))
    return min(t, _round_up(n, 128))


def _col_tile(m, dim, budget_bytes):
    """Column (lane) tile for outer kernels; prefer >=256 for v6e/v7x MXUs."""
    m = int(m)
    if m < 128:
        return max(m, 1)
    for cand in (512, 256):
        if cand <= _round_up(m, 128) and 2 * cand * 2 * dim <= budget_bytes:
            return cand
    return 128


def _outer_tiles(n, m, dim, resident_bytes=0, extra_row_bytes=0):
    budget = max(_VMEM_LIMIT - _HEADROOM - int(resident_bytes), 1 << 20)
    tj = _col_tile(m, dim, budget // 4)
    per_row = 2 * dim + 4 * tj + extra_row_bytes   # bf16 x row + f32 out row
    resid = resident_bytes + 2 * (tj * 2 * dim)    # double-buffered y tile
    ti = _row_tile(n, per_row, resid)
    return ti, tj


# ----------------------------- Pallas kernels ------------------------------

def _row_sum_lane(prod):
    """Sum a (rows, d) f32 block over d with the result laid out along lanes.

    Implemented as a ones-matvec on the MXU so the (1, rows) result is born
    lane-oriented -> unmasked lane-dense stores, no sublane->lane relayout.
    """
    ones = jnp.ones((1, prod.shape[-1]), jnp.float32)
    return lax.dot_general(ones, prod, (((1,), (1,)), ((), ())),
                           preferred_element_type=jnp.float32)


def _inner_pair_kernel(x_ref, y_ref, o_ref):
    # o[0, n] = sum_d x[n, d] * y[n, d]   (f32 math on bf16-rounded inputs)
    prod = x_ref[...].astype(jnp.float32) * y_ref[...].astype(jnp.float32)
    o_ref[...] = _row_sum_lane(prod)


def _outer_kernel(x_ref, y_ref, o_ref):
    # o = x @ y.T : bf16 MXU, f32 accumulation, contract last dims (no .T copy)
    o_ref[...] = lax.dot_general(x_ref[...], y_ref[...],
                                 (((1,), (1,)), ((), ())),
                                 preferred_element_type=jnp.float32)


def _bilinear_pair_kernel(x_ref, y_ref, w_ref, b_ref, o_ref):
    # o[0, n] = x[n] @ W @ y[n] + b    (nn.Bilinear(dim, dim, 1))
    xw = jnp.dot(x_ref[...], w_ref[...], preferred_element_type=jnp.float32)
    prod = xw * y_ref[...].astype(jnp.float32)
    o_ref[...] = _row_sum_lane(prod) + b_ref[0]


def _bilinear_outer_kernel(x_ref, w_ref, y_ref, o_ref, xw_ref):
    # Fused (x @ W) @ y.T : the xW row tile is computed once per i (at j == 0)
    # into VMEM scratch and reused across the whole j sweep.
    @pl.when(pl.program_id(1) == 0)
    def _():
        xw_ref[...] = jnp.dot(
            x_ref[...], w_ref[...],
            preferred_element_type=jnp.float32).astype(jnp.bfloat16)

    o_ref[...] = lax.dot_general(xw_ref[...], y_ref[...],
                                 (((1,), (1,)), ((), ())),
                                 preferred_element_type=jnp.float32)


def _mlp_kernel(x_ref, y_ref, w1x_ref, w1y_ref, b1_ref, w2t_ref, b2_ref,
                o_ref):
    # h = relu(cat([x, y], 1) @ W1 + b1) == relu(x @ W1x + y @ W1y + b1)
    h = (jnp.dot(x_ref[...], w1x_ref[...], preferred_element_type=jnp.float32)
         + jnp.dot(y_ref[...], w1y_ref[...], preferred_element_type=jnp.float32)
         + b1_ref[...])
    h = jnp.maximum(h, 0.0).astype(jnp.bfloat16)
    # o = (h @ W2 + b2).T, produced directly as a lane-dense (d2, tile) block
    o_ref[...] = (lax.dot_general(w2t_ref[...], h, (((1,), (1,)), ((), ())),
                                  preferred_element_type=jnp.float32)
                  + b2_ref[...])


# ------------------------------ pallas wrappers ------------------------------

def _inner_pair(x, y):
    n, dim = x.shape
    t = _row_tile(n, 4 * dim + 4)
    out = pl.pallas_call(
        _inner_pair_kernel,
        out_shape=jax.ShapeDtypeStruct((1, n), jnp.float32),
        grid=(pl.cdiv(n, t),),
        in_specs=[pl.BlockSpec((t, dim), lambda i: (i, 0)),
                  pl.BlockSpec((t, dim), lambda i: (i, 0))],
        out_specs=pl.BlockSpec((1, t), lambda i: (0, i)),
        compiler_params=_params("parallel"),
    )(x, y)
    return out[0]


def _outer(x, y):
    n, dim = x.shape
    m = y.shape[0]
    ti, tj = _outer_tiles(n, m, dim)
    out = pl.pallas_call(
        _outer_kernel,
        out_shape=jax.ShapeDtypeStruct((n, m), jnp.float32),
        grid=(pl.cdiv(n, ti), pl.cdiv(m, tj)),
        in_specs=[pl.BlockSpec((ti, dim), lambda i, j: (i, 0)),
                  pl.BlockSpec((tj, dim), lambda i, j: (j, 0))],
        out_specs=pl.BlockSpec((ti, tj), lambda i, j: (i, j)),
        compiler_params=_params("parallel", "parallel"),
    )(x, y)
    return out


def _bilinear_pair(x, y, w, b):
    n, dim = x.shape
    w_bytes = 2 * dim * dim * 2  # conservative (double-buffered) estimate
    t = _row_tile(n, 4 * dim + 4, resident_bytes=w_bytes)
    out = pl.pallas_call(
        _bilinear_pair_kernel,
        out_shape=jax.ShapeDtypeStruct((1, n), jnp.float32),
        grid=(pl.cdiv(n, t),),
        in_specs=[pl.BlockSpec((t, dim), lambda i: (i, 0)),
                  pl.BlockSpec((t, dim), lambda i: (i, 0)),
                  _const_spec((dim, dim)),
                  _SMEM_SPEC],
        out_specs=pl.BlockSpec((1, t), lambda i: (0, i)),
        compiler_params=_params("parallel"),
    )(x, y, w, b)
    return out[0]


def _bilinear_outer(x, y, w):
    n, dim = x.shape
    m = y.shape[0]
    w_bytes = 2 * dim * dim * 2
    # extra_row_bytes: bf16 xW scratch row held alongside the x tile
    ti, tj = _outer_tiles(n, m, dim, resident_bytes=w_bytes,
                          extra_row_bytes=2 * dim)
    out = pl.pallas_call(
        _bilinear_outer_kernel,
        out_shape=jax.ShapeDtypeStruct((n, m), jnp.float32),
        grid=(pl.cdiv(n, ti), pl.cdiv(m, tj)),
        in_specs=[pl.BlockSpec((ti, dim), lambda i, j: (i, 0)),
                  _const_spec((dim, dim)),
                  pl.BlockSpec((tj, dim), lambda i, j: (j, 0))],
        out_specs=pl.BlockSpec((ti, tj), lambda i, j: (i, j)),
        scratch_shapes=[pltpu.VMEM((ti, dim), jnp.bfloat16)],
        compiler_params=_params("parallel", "arbitrary"),
    )(x, w, y)
    return out


def _mlp(x, y, w1x, w1y, b1, w2t, b2col):
    n, dim = x.shape
    d1 = w1x.shape[1]
    d2 = w2t.shape[0]
    resident = 2 * (2 * dim * d1 * 2 + d2 * d1 * 2 + 4 * d1 + 4 * d2)
    per_row = 4 * dim + 6 * d1 + 4 * d2   # x,y bf16 rows + h f32/bf16 + out
    t = _row_tile(n, per_row, resident_bytes=resident)
    out = pl.pallas_call(
        _mlp_kernel,
        out_shape=jax.ShapeDtypeStruct((d2, n), jnp.float32),
        grid=(pl.cdiv(n, t),),
        in_specs=[pl.BlockSpec((t, dim), lambda i: (i, 0)),
                  pl.BlockSpec((t, dim), lambda i: (i, 0)),
                  _const_spec((dim, d1)),
                  _const_spec((dim, d1)),
                  _const_spec((1, d1)),
                  _const_spec((d2, d1)),
                  _const_spec((d2, 1))],
        out_specs=pl.BlockSpec((d2, t), lambda i: (0, i)),
        compiler_params=_params("parallel"),
    )(x, y, w1x, w1y, b1, w2t, b2col)
    return out[0] if d2 == 1 else out.T


# ------------------------------ parameter init ------------------------------

def _glorot(key, shape):
    fan_in, fan_out = shape[-2], shape[-1]
    limit = jnp.sqrt(6.0 / (fan_in + fan_out))
    return jax.random.uniform(key, shape, jnp.float32, -limit, limit)


def _as_bf16(a):
    return jnp.asarray(a, jnp.bfloat16)


# ------------------------------ Discriminator -------------------------------

class Discriminator:
    """JAX/Pallas port of the opengcl Discriminator (inner / bilinear / mlp)."""

    def __init__(self, name, dim, mlp_dim=None, key=None):
        if key is None:
            key = jax.random.PRNGKey(0)
        self.name = name.lower()
        self.dim = dim
        self.mlp_dim = mlp_dim
        k1, k2 = jax.random.split(key, 2)
        if self.name == 'bilinear':
            # nn.Bilinear(dim, dim, 1): weight (1, dim, dim) squeezed, bias (1,)
            self.bil_w = _glorot(k1, (dim, dim)).astype(jnp.bfloat16)
            self.bil_b = jnp.zeros((1,), jnp.float32)
            # glorot([dim, dim]) used by the outer-product path
            self.weight = _glorot(k2, (dim, dim)).astype(jnp.bfloat16)
        elif self.name == 'mlp':
            assert mlp_dim is not None and len(mlp_dim) == 3, \
                "this port implements the common 2-layer MLP head (len(mlp_dim)==3)"
            # TODO(synk): general-depth MLP (len(mlp_dim) > 3) would need a
            # chain of pallas_calls or an unrolled kernel.
            d0, d1, d2 = mlp_dim
            assert d0 == 2 * dim, "mlp_dim[0] must equal 2*dim (concat of x,y)"
            w1 = _glorot(k1, (d0, d1))
            w2 = _glorot(k2, (d1, d2))
            self.b1 = jnp.zeros((1, d1), jnp.float32)
            self.b2 = jnp.zeros((1, d2), jnp.float32)
            # kernel-side layouts: split W1 (no in-kernel concat), transposed
            # W2 (lane-dense final matmul), column-shaped b2; bf16 weights.
            self.w1x = w1[:dim].astype(jnp.bfloat16)
            self.w1y = w1[dim:].astype(jnp.bfloat16)
            self.w2t = w2.T.astype(jnp.bfloat16)
            self.b2col = self.b2.T
        elif self.name != 'inner':
            raise ValueError(f"unknown discriminator {name!r}")

    def __call__(self, x, y, outer=False):
        # bf16 inputs halve HBM traffic; every matmul accumulates in f32.
        x = _as_bf16(x)
        y = _as_bf16(y)
        if self.name == 'inner':
            return _outer(x, y) if outer else _inner_pair(x, y)
        if self.name == 'bilinear':
            if outer:
                return _bilinear_outer(x, y, self.weight)
            return _bilinear_pair(x, y, self.bil_w, self.bil_b)
        return _mlp(x, y, self.w1x, self.w1y, self.b1, self.w2t, self.b2col)


# ---------------------------------- main ------------------------------------

if __name__ == "__main__":
    key = jax.random.PRNGKey(0)
    kx, ky, kp = jax.random.split(key, 3)

    N, DIM = 8, 32
    x = jax.random.normal(kx, (N, DIM), jnp.float32)
    y = jax.random.normal(ky, (N, DIM), jnp.float32)
    # References use the same bf16-rounded operands the kernels consume.
    xb = x.astype(jnp.bfloat16).astype(jnp.float32)
    yb = y.astype(jnp.bfloat16).astype(jnp.float32)

    # --- inner ---
    disc = Discriminator('inner', DIM, key=kp)
    s_pair = jax.block_until_ready(disc(x, y, outer=False))
    s_outer = jax.block_until_ready(disc(x, y, outer=True))
    assert s_pair.shape == (N,) and s_outer.shape == (N, N)
    assert jnp.allclose(s_pair, jnp.sum(xb * yb, axis=-1), atol=5e-2)
    assert jnp.allclose(s_outer, xb @ yb.T, atol=5e-2)

    # --- bilinear ---
    disc = Discriminator('bilinear', DIM, key=kp)
    s_pair = jax.block_until_ready(disc(x, y, outer=False))
    s_outer = jax.block_until_ready(disc(x, y, outer=True))
    bw = disc.bil_w.astype(jnp.float32)
    ow = disc.weight.astype(jnp.float32)
    ref_pair = jnp.einsum('ni,ij,nj->n', xb, bw, yb) + disc.bil_b[0]
    xw_b = (xb @ ow).astype(jnp.bfloat16).astype(jnp.float32)
    ref_outer = xw_b @ yb.T
    assert jnp.allclose(s_pair, ref_pair, atol=5e-2)
    assert jnp.allclose(s_outer, ref_outer, atol=5e-2)

    # --- mlp (mlp_dim[0] must equal 2*dim for the concat) ---
    mlp_dim = [2 * DIM, 32, 1]
    disc = Discriminator('mlp', DIM, mlp_dim=mlp_dim, key=kp)
    s_mlp = jax.block_until_ready(disc(x, y))
    w1 = jnp.concatenate([disc.w1x, disc.w1y], axis=0).astype(jnp.float32)
    w2 = disc.w2t.T.astype(jnp.float32)
    h = jnp.maximum(jnp.concatenate([xb, yb], axis=1) @ w1 + disc.b1, 0.0)
    h = h.astype(jnp.bfloat16).astype(jnp.float32)
    ref_mlp = jnp.squeeze(h @ w2 + disc.b2, axis=-1)
    assert s_mlp.shape == (N,)
    assert jnp.allclose(s_mlp, ref_mlp, atol=5e-2)

    print("KERNEL_OK")
</pallas_src>

<mosaic_0001>
module attributes {stable_mosaic.version = 11 : i64} {
  func.func @_inner_pair_kernel(%arg0: i32, %arg1: memref<8x32xbf16, #tpu.memory_space<vmem>>, %arg2: memref<8x32xbf16, #tpu.memory_space<vmem>>, %arg3: memref<1x8xf32, #tpu.memory_space<vmem>>) attributes {dimension_semantics = [#tpu.dimension_semantics<parallel>], iteration_bounds = array<i64: 1>, scalar_prefetch = 0 : i64, scratch_operands = 0 : i64, tpu.core_type = #tpu.core_type<tc>, window_params = [{transform_indices = @transform_0, window_bounds = array<i64: 8, 32>}, {transform_indices = @transform_1, window_bounds = array<i64: 8, 32>}, {transform_indices = @transform_2, window_bounds = array<i64: 1, 8>}]} {
    %c0 = arith.constant 0 : index
    %c0_0 = arith.constant 0 : index
    %0 = vector.load %arg1[%c0, %c0_0] : memref<8x32xbf16, #tpu.memory_space<vmem>>, vector<8x32xbf16>
    %1 = arith.extf %0 : vector<8x32xbf16> to vector<8x32xf32>
    %c0_1 = arith.constant 0 : index
    %c0_2 = arith.constant 0 : index
    %2 = vector.load %arg2[%c0_1, %c0_2] : memref<8x32xbf16, #tpu.memory_space<vmem>>, vector<8x32xbf16>
    %3 = arith.extf %2 : vector<8x32xbf16> to vector<8x32xf32>
    %4 = arith.mulf %1, %3 : vector<8x32xf32>
    %cst = arith.constant 1.000000e+00 : f32
    %5 = vector.broadcast %cst : f32 to vector<1x32xf32>
    %cst_3 = arith.constant dense<0.000000e+00> : vector<1x8xf32>
    %6 = tpu.matmul %5, %4, %cst_3 {dimension_numbers = #tpu.dot_dimension_numbers<[1], [1], [0], [0], [0, 0, 1, 0], [], []>} : vector<1x32xf32>, vector<8x32xf32>, vector<1x8xf32> -> vector<1x8xf32>
    %c0_4 = arith.constant 0 : index
    %c0_5 = arith.constant 0 : index
    %7 = vector.load %arg3[%c0_4, %c0_5] : memref<1x8xf32, #tpu.memory_space<vmem>>, vector<1x8xf32>
    tpu.vector_store %arg3[%c0_4, %c0_5], %6 {strides = array<i32>} : memref<1x8xf32, #tpu.memory_space<vmem>>, vector<1x8xf32>,
    return
  }
  func.func @transform_0(%arg0: i32) -> (i32, i32) {
    %c0_i32 = arith.constant 0 : i32
    %c0_i32_0 = arith.constant 0 : i32
    return %arg0, %c0_i32 : i32, i32
  }
  func.func @transform_1(%arg0: i32) -> (i32, i32) {
    %c0_i32 = arith.constant 0 : i32
    %c0_i32_0 = arith.constant 0 : i32
    return %arg0, %c0_i32 : i32, i32
  }
  func.func @transform_2(%arg0: i32) -> (i32, i32) {
    %c0_i32 = arith.constant 0 : i32
    %c0_i32_0 = arith.constant 0 : i32
    return %c0_i32, %arg0 : i32, i32
  }
}

</mosaic_0001>

<llo_original>
// kernel: tpu_custom_call.1
$region0: #{tpu_custom_call.1}
  #allocation0 [shape = 'u32[]', space=smem, size = 0x4, offset = 0x4, fixed_abs, tag = 'smem constant byte address 0x4 - core index']
  #allocation1 [shape = 'u32[144,128]{1,0:T(1,128)}', space=vmem, size = 0x12000, scoped, tag = 'internal scratch']
  %s0 = inlined_call_operand.hbm [shape: bf16[8,32], index: 0, kind: input, shape index: {}]
  %s1 = inlined_call_operand.hbm [shape: bf16[8,32], index: 1, kind: input, shape index: {}]
  %s2 = inlined_call_operand.hbm [shape: f32[1,8], index: 2, kind: output, shape index: {}]
  %s3 = sld [smem:[#allocation0]]
  $region26: #{tpu_custom_call.1} parent=0
    _
  %s5 = ssub.s32 1, %s3
  %s6 = scalar_select 0, %s5, %s3
  $region1: #{tpu_custom_call.1} parent=0
    #allocation2 [shape = 'u8[2048]{0}', space=vmem, size = 0x800, scoped, tag = 'input window, operand 0, single buffered']
    #allocation3 [shape = 's32[1]{0}', space=sflag, size = 0x4, scoped, tag = 'scoped memory for tpu_custom_call.1']
    #allocation4 [shape = 's32[1]{0}', space=sflag, size = 0x4, scoped, tag = 'scoped memory for tpu_custom_call.1']
    #allocation5 [shape = 'u8[2048]{0}', space=vmem, size = 0x800, scoped, tag = 'input window, operand 1, single buffered']
    #allocation6 [shape = 's32[1]{0}', space=sflag, size = 0x4, scoped, tag = 'scoped memory for tpu_custom_call.1']
    #allocation7 [shape = 'u8[512]{0}', space=vmem, size = 0x400, scoped, tag = 'output window, operand 0, single buffered']
    %7 = vsyncpa [#allocation3], 0
    %8 = vsyncpa [#allocation6], 0
    %9 = vsyncpa [#allocation4], 0
    // Predicated region
    $region2: #{tpu_custom_call.1} parent=1 // pred_check
      _
    $region3: #{tpu_custom_call.1} parent=1 // pred_check_branch
      %11 = sbr.rel (0) target = $region5
    $region4: #{tpu_custom_call.1} parent=1 // pred_region
      %s13 = ssub.s32 64, 64
      %14 = vsyncadd [#allocation3], %s13
      %s16 = sshll.u32 [#allocation2], 4
      %s17 = int_to_ptr.vmem [resolvable:$true] %s16
      %19 = dma.hbm_to_vmem [thread:$0]  %s0, 64, %s17, [#allocation3]
    $region5: #{tpu_custom_call.1} parent=1 // pred_fallthru
      _
    // Predicated region
    $region6: #{tpu_custom_call.1} parent=1 // pred_check
      _
    $region7: #{tpu_custom_call.1} parent=1 // pred_check_branch
      %21 = sbr.rel (0) target = $region9
    $region8: #{tpu_custom_call.1} parent=1 // pred_region
      %s23 = ssub.s32 64, 64
      %24 = vsyncadd [#allocation6], %s23
      %s26 = sshll.u32 [#allocation5], 4
      %s27 = int_to_ptr.vmem [resolvable:$true] %s26
      %29 = dma.hbm_to_vmem [thread:$0]  %s1, 64, %s27, [#allocation6]
    $region9: #{tpu_custom_call.1} parent=1 // pred_fallthru
      _
    // Predicated region
    $region10: #{tpu_custom_call.1} parent=1 // pred_check
      _
    $region11: #{tpu_custom_call.1} parent=1 // pred_check_branch
      %31 = sbr.rel (0) target = $region13
    $region12: #{tpu_custom_call.1} parent=1 // pred_region
      %32 = dma.done [#allocation3], 64
    $region13: #{tpu_custom_call.1} parent=1 // pred_fallthru
      _
    // Predicated region
    $region14: #{tpu_custom_call.1} parent=1 // pred_check
      _
    $region15: #{tpu_custom_call.1} parent=1 // pred_check_branch
      %34 = sbr.rel (0) target = $region17
    $region16: #{tpu_custom_call.1} parent=1 // pred_region
      %35 = dma.done [#allocation6], 64
    $region17: #{tpu_custom_call.1} parent=1 // pred_fallthru
      _
    %v36 = vld [vmem:[#allocation2] sm:$0xf]
    %v37 = vunpack.c.l.bf16 %v36
    %v38 = vld [vmem:[#allocation5] sm:$0xf]
    %v39 = vunpack.c.l.bf16 %v38
    %v40 = vmul.f32 %v37, %v39
    %vm41 = vcmask 261120
    %v43 = vsel %vm41, 1.0, 0
    %v46 = vsel %vm41, %v40, 0
    %48 = vmatprep.subr.mxu0 0.0
    %49 = vmatpush1.xpose.msra.mxu0 0.0
    %50 = vmatprep.subr.mxu0 0.0
    %51 = vmatpush1.xpose.msra.mxu0 0.0
    %52 = vmatprep.subr.mxu0 0.0
    %53 = vmatpush1.xpose.msra.mxu0 0.0
    %54 = vmatprep.subr.mxu0 0.0
    %55 = vmatpush1.xpose.msra.mxu0 0.0
    %56 = vmatprep.subr.mxu0 0.0
    %57 = vmatpush1.xpose.msra.mxu0 0.0
    %58 = vmatprep.subr.mxu0 0.0
    %59 = vmatpush1.xpose.msra.mxu0 0.0
    %60 = vmatprep.subr.mxu0 0.0
    %61 = vmatpush1.xpose.msra.mxu0 0.0
    %62 = vmatprep.subr.mxu0 0.0
    %63 = vmatpush1.xpose.msra.mxu0 0.0
    %64 = vmatprep.subr.mxu0 0.0
    %65 = vmatpush1.xpose.msra.mxu0 0.0
    %66 = vmatprep.subr.mxu0 0.0
    %67 = vmatpush1.xpose.msra.mxu0 0.0
    %68 = vmatprep.subr.mxu0 0.0
    %69 = vmatpush1.xpose.msra.mxu0 0.0
    %70 = vmatprep.subr.mxu0 0.0
    %71 = vmatpush1.xpose.msra.mxu0 0.0
    %72 = vmatprep.subr.mxu0 0.0
    %73 = vmatpush1.xpose.msra.mxu0 0.0
    %74 = vmatprep.subr.mxu0 0.0
    %75 = vmatpush1.xpose.msra.mxu0 0.0
    %76 = vmatprep.subr.mxu0 0.0
    %77 = vmatpush1.xpose.msra.mxu0 0.0
    %78 = vmatprep.subr.mxu0 0.0
    %79 = vmatpush1.xpose.msra.mxu0 %v46
    %80 = vmatprep.subr.mxu0 0.0
    %81 = vmatpush2.xpose.msra.mxu0 0.0
    %82 = vmatprep.subr.mxu0 0.0
    %83 = vmatpush2.xpose.msra.mxu0 0.0
    %84 = vmatprep.subr.mxu0 0.0
    %85 = vmatpush2.xpose.msra.mxu0 0.0
    %86 = vmatprep.subr.mxu0 0.0
    %87 = vmatpush2.xpose.msra.mxu0 0.0
    %88 = vmatprep.subr.mxu0 0.0
    %89 = vmatpush2.xpose.msra.mxu0 0.0
    %90 = vmatprep.subr.mxu0 0.0
    %91 = vmatpush2.xpose.msra.mxu0 0.0
    %92 = vmatprep.subr.mxu0 0.0
    %93 = vmatpush2.xpose.msra.mxu0 0.0
    %94 = vmatprep.subr.mxu0 0.0
    %95 = vmatpush2.xpose.msra.mxu0 0.0
    %96 = vmatprep.subr.mxu0 0.0
    %97 = vmatpush2.xpose.msra.mxu0 0.0
    %98 = vmatprep.subr.mxu0 0.0
    %99 = vmatpush2.xpose.msra.mxu0 0.0
    %100 = vmatprep.subr.mxu0 0.0
    %101 = vmatpush2.xpose.msra.mxu0 0.0
    %102 = vmatprep.subr.mxu0 0.0
    %103 = vmatpush2.xpose.msra.mxu0 0.0
    %104 = vmatprep.subr.mxu0 0.0
    %105 = vmatpush2.xpose.msra.mxu0 0.0
    %106 = vmatprep.subr.mxu0 0.0
    %107 = vmatpush2.xpose.msra.mxu0 0.0
    %108 = vmatprep.subr.mxu0 0.0
    %109 = vmatpush2.xpose.msra.mxu0 0.0
    %110 = vmatprep.subr.mxu0 0.0
    %111 = vmatpush2.xpose.msra.mxu0 0.0
    %112 = vmatprep.mubr.f32.mxu0 0.0
    %113 = vmatmul.mubr.f32.gmra.mxu0 %v43
    %v114 = vpop.f32.mrf.mxu0
    %v115 = vadd.f32 0.0, %v114
    %v116 = vpop.f32.mrf.mxu0
    %117 = vdwg.mxu0
    %vm118 = vcmask 57344
    %119 = vst.msk [vmem:[#allocation7] sm:$0x1] %vm118, %v115
    // Predicated region
    $region18: #{tpu_custom_call.1} parent=1 // pred_check
      _
    $region19: #{tpu_custom_call.1} parent=1 // pred_check_branch
      %121 = sbr.rel (0) target = $region21
    $region20: #{tpu_custom_call.1} parent=1 // pred_region
      %s123 = ssub.s32 16, 16
      %124 = vsyncadd [#allocation4], %s123
      %s126 = sshll.u32 [#allocation7], 4
      %s127 = int_to_ptr.vmem [resolvable:$true] %s126
      %129 = dma.vmem_to_hbm [thread:$0]  %s127, 16, %s2, [#allocation4]
    $region21: #{tpu_custom_call.1} parent=1 // pred_fallthru
      _
    // Predicated region
    $region22: #{tpu_custom_call.1} parent=1 // pred_check
      _
    $region23: #{tpu_custom_call.1} parent=1 // pred_check_branch
      %131 = sbr.rel (0) target = $region25
    $region24: #{tpu_custom_call.1} parent=1 // pred_region
      %132 = dma.done [#allocation4], 16
    $region25: #{tpu_custom_call.1} parent=1 // pred_fallthru
      _
    %133 = vsyncpa [#allocation3], 1
    %134 = vsyncpa [#allocation6], 1
    %135 = vsyncpa [#allocation4], 1

</llo_original>
